<compile_context>
chip_gen: v5e
topology: v5e:2x2
jax: 0.10.0
libtpu: 0.0.40
codegen_flags: <defaults>
</compile_context>

<pallas_src>
import jax
import jax.numpy as jnp
from jax import lax
from jax.experimental import pallas as pl
from jax.experimental.pallas import tpu as pltpu

# ---------------------------------------------------------------------------
# Model hyperparameters (synthetic inner model wrapped by _CustomDataParallel)
# ---------------------------------------------------------------------------
N, C_IN, H, W = 2, 4, 16, 16      # batch, channels, spatial (NCHW input)
KH = KW = 3                       # conv kernel, pad=1, stride=1
C_OUT = 8                         # conv output channels
NUM_CLASSES = 10                  # linear head
HW = H * W
HP, WP = H + 2, W + 2             # padded spatial dims
WCIN = W * C_IN                   # 64  : lanes of one windowed input row
WCOUT = W * C_OUT                 # 128 : lanes of one conv-output row
KTAPS = KH * KW                   # 9 conv taps
KDIM = KTAPS * WCIN               # 576 : im2col contraction depth
KPAD = ((KDIM + 127) // 128) * 128  # 640 : lane-dense contraction depth
CLS_PAD = 128                     # lane-dense (zero-padded) logits width


def _fused_forward_kernel(cols_ref, wslab_ref, bc_ref, pool_ref, g_ref, bf_ref,
                          out_ref):
    """Whole-batch fused forward (conv -> relu -> mean-pool -> fc).

    cols_ref : (N*H, KPAD)     im2col slab, row=(n,h), col=(tap, w, c), zero-padded
    wslab_ref: (KPAD, WCOUT)   block-diagonal conv weight slab (tap-major rows)
    bc_ref   : (1, WCOUT)      conv bias replicated over w
    pool_ref : (N, N*H)        block-ones pooling matrix (sum over h per sample)
    g_ref    : (WCOUT, CLS_PAD) FC weight, w-replicated, scaled by 1/HW, class-padded
    bf_ref   : (1, CLS_PAD)    FC bias (class-padded)
    out_ref  : (N, CLS_PAD)    padded logits (lane-dense)
    """
    f32 = jnp.float32
    # Conv as one deep-contraction MXU matmul: y[(n,h), (w,o)] = conv(x)[n,o,h,w]
    y = jnp.dot(cols_ref[...], wslab_ref[...], preferred_element_type=f32)
    yr = jnp.maximum(y + bc_ref[...], 0.0)                       # bias + ReLU
    # Sum over h per sample (block-ones matmul); sum over w and o is folded into
    # the w-replicated FC weight g (which also carries the 1/HW mean scale).
    pooled = jnp.dot(pool_ref[...], yr, preferred_element_type=f32)   # (N, WCOUT)
    logits = jnp.dot(pooled, g_ref[...], preferred_element_type=f32) + bf_ref[...]
    out_ref[...] = logits                                        # one full-block store


def custom_data_parallel_forward(x, conv_w, conv_b, fc_w, fc_b):
    """Emulates _CustomDataParallel(model).forward(x) as one fused TPU kernel.

    x      : (N, C_IN, H, W)        NCHW, like PyTorch
    conv_w : (C_OUT, C_IN, KH, KW)  PyTorch Conv2d weight layout
    conv_b : (C_OUT,)
    fc_w   : (NUM_CLASSES, C_OUT)   PyTorch Linear weight layout
    fc_b   : (NUM_CLASSES,)
    returns: (N, NUM_CLASSES) logits
    """
    f32 = jnp.float32
    x = x.astype(f32)

    # ---- im2col slab (wrapper-side, ~80 KB) --------------------------------
    xp = jnp.pad(x, ((0, 0), (0, 0), (1, 1), (1, 1)))            # (N, C, HP, WP)
    xnhwc = jnp.transpose(xp, (0, 2, 3, 1))                      # (N, HP, WP, C)
    cols = []
    for k in range(KTAPS):
        dh, dw = divmod(k, KW)
        win = xnhwc[:, dh:dh + H, dw:dw + W, :]                  # (N, H, W, C)
        cols.append(win.reshape(N * H, WCIN))
    cols = jnp.concatenate(cols, axis=1)                         # (N*H, KDIM)
    cols = jnp.pad(cols, ((0, 0), (0, KPAD - KDIM)))             # (N*H, KPAD)

    # ---- block-diagonal conv weight slab (wrapper-side) --------------------
    # slab[k*WCIN + w*C_IN + c, w'*C_OUT + o] = conv_w[o, c, dh, dw] * (w == w')
    eye_w = jnp.eye(W, dtype=f32)
    slabs = []
    for k in range(KTAPS):
        dh, dw = divmod(k, KW)
        wt_k = conv_w[:, :, dh, dw].T.astype(f32)                # (C_IN, C_OUT)
        slabs.append(jnp.kron(eye_w, wt_k))                      # (WCIN, WCOUT)
    wslab = jnp.concatenate(slabs, axis=0)                       # (KDIM, WCOUT)
    wslab = jnp.pad(wslab, ((0, KPAD - KDIM), (0, 0)))           # (KPAD, WCOUT)

    # ---- epilogue operands (wrapper-side) -----------------------------------
    bc_big = jnp.tile(conv_b.astype(f32), W).reshape(1, WCOUT)   # (1, WCOUT)
    pool = jnp.kron(jnp.eye(N, dtype=f32), jnp.ones((1, H), f32))  # (N, N*H)
    g = jnp.tile(fc_w.T.astype(f32), (W, 1)) * (1.0 / HW)        # (WCOUT, NUM_CLASSES)
    g_pad = jnp.zeros((WCOUT, CLS_PAD), f32).at[:, :NUM_CLASSES].set(g)
    bf_pad = jnp.zeros((1, CLS_PAD), f32).at[0, :NUM_CLASSES].set(fc_b.astype(f32))

    out_pad = pl.pallas_call(
        _fused_forward_kernel,
        out_shape=jax.ShapeDtypeStruct((N, CLS_PAD), jnp.float32),
        grid=(1,),  # whole batch in one step; see TODO below
        in_specs=[
            pl.BlockSpec((N * H, KPAD), lambda i: (0, 0)),
            pl.BlockSpec((KPAD, WCOUT), lambda i: (0, 0)),
            pl.BlockSpec((1, WCOUT), lambda i: (0, 0)),
            pl.BlockSpec((N, N * H), lambda i: (0, 0)),
            pl.BlockSpec((WCOUT, CLS_PAD), lambda i: (0, 0)),
            pl.BlockSpec((1, CLS_PAD), lambda i: (0, 0)),
        ],
        out_specs=pl.BlockSpec((N, CLS_PAD), lambda i: (0, 0)),
        compiler_params=pltpu.CompilerParams(
            dimension_semantics=("arbitrary",),
        ),
    )(cols, wslab, bc_big, pool, g_pad, bf_pad)
    return out_pad[:, :NUM_CLASSES]


def _reference_forward(x, conv_w, conv_b, fc_w, fc_b):
    """Pure-JAX reference of the same inner model (for correctness check)."""
    y = lax.conv_general_dilated(
        x, conv_w, window_strides=(1, 1), padding=((1, 1), (1, 1)),
        dimension_numbers=("NCHW", "OIHW", "NCHW"))
    y = jax.nn.relu(y + conv_b.reshape(1, C_OUT, 1, 1))
    pooled = jnp.mean(y, axis=(2, 3))                            # (N, C_OUT)
    return pooled @ fc_w.T + fc_b


if __name__ == "__main__":
    key = jax.random.PRNGKey(0)
    kx, kcw, kcb, kfw, kfb = jax.random.split(key, 5)

    x = jax.random.normal(kx, (N, C_IN, H, W), dtype=jnp.float32)
    conv_w = jax.random.normal(kcw, (C_OUT, C_IN, KH, KW), dtype=jnp.float32) * 0.1
    conv_b = jax.random.normal(kcb, (C_OUT,), dtype=jnp.float32) * 0.1
    fc_w = jax.random.normal(kfw, (NUM_CLASSES, C_OUT), dtype=jnp.float32) * 0.1
    fc_b = jax.random.normal(kfb, (NUM_CLASSES,), dtype=jnp.float32) * 0.1

    logits = custom_data_parallel_forward(x, conv_w, conv_b, fc_w, fc_b)
    logits = jax.block_until_ready(logits)

    ref = _reference_forward(x, conv_w, conv_b, fc_w, fc_b)
    assert logits.shape == (N, NUM_CLASSES)
    assert jnp.allclose(logits, ref, atol=1e-3, rtol=1e-3), "mismatch vs reference"

    # TODO(synk): true DataParallel multi-GPU replica scatter/gather (.cuda()
    # placement, __getattr__ forwarding) has no single-kernel Pallas equivalent;
    # it is emulated by this single fused TPU kernel.  If the batch grows (N >~ 64),
    # add a leading batch-tile grid axis with dimension_semantics=("parallel", ...)
    # and keep weight index_maps constant so weights stay resident per TensorCore
    # (2 TCs on v7x).
    print("KERNEL_OK")
</pallas_src>

<mosaic_0001>
module attributes {stable_mosaic.version = 11 : i64} {
  func.func @_fused_forward_kernel(%arg0: i32, %arg1: memref<32x640xf32, #tpu.memory_space<vmem>>, %arg2: memref<640x128xf32, #tpu.memory_space<vmem>>, %arg3: memref<1x128xf32, #tpu.memory_space<vmem>>, %arg4: memref<2x32xf32, #tpu.memory_space<vmem>>, %arg5: memref<128x128xf32, #tpu.memory_space<vmem>>, %arg6: memref<1x128xf32, #tpu.memory_space<vmem>>, %arg7: memref<2x128xf32, #tpu.memory_space<vmem>>) attributes {dimension_semantics = [#tpu.dimension_semantics<arbitrary>], iteration_bounds = array<i64: 1>, scalar_prefetch = 0 : i64, scratch_operands = 0 : i64, tpu.core_type = #tpu.core_type<tc>, window_params = [{pipeline_mode = #tpu.pipeline_mode<synchronous>, transform_indices = @transform_0, window_bounds = array<i64: 32, 640>}, {pipeline_mode = #tpu.pipeline_mode<synchronous>, transform_indices = @transform_1, window_bounds = array<i64: 640, 128>}, {pipeline_mode = #tpu.pipeline_mode<synchronous>, transform_indices = @transform_2, window_bounds = array<i64: 1, 128>}, {pipeline_mode = #tpu.pipeline_mode<synchronous>, transform_indices = @transform_3, window_bounds = array<i64: 2, 32>}, {pipeline_mode = #tpu.pipeline_mode<synchronous>, transform_indices = @transform_4, window_bounds = array<i64: 128, 128>}, {pipeline_mode = #tpu.pipeline_mode<synchronous>, transform_indices = @transform_5, window_bounds = array<i64: 1, 128>}, {pipeline_mode = #tpu.pipeline_mode<synchronous>, transform_indices = @transform_6, window_bounds = array<i64: 2, 128>}]} {
    %c0 = arith.constant 0 : index
    %c0_0 = arith.constant 0 : index
    %0 = vector.load %arg1[%c0, %c0_0] : memref<32x640xf32, #tpu.memory_space<vmem>>, vector<32x640xf32>
    %c0_1 = arith.constant 0 : index
    %c0_2 = arith.constant 0 : index
    %1 = vector.load %arg2[%c0_1, %c0_2] : memref<640x128xf32, #tpu.memory_space<vmem>>, vector<640x128xf32>
    %cst = arith.constant dense<0.000000e+00> : vector<32x128xf32>
    %2 = tpu.matmul %0, %1, %cst {dimension_numbers = #tpu.dot_dimension_numbers<[1], [0], [0], [1], [0, 0, 1, 1], [], []>} : vector<32x640xf32>, vector<640x128xf32>, vector<32x128xf32> -> vector<32x128xf32>
    %c0_3 = arith.constant 0 : index
    %c0_4 = arith.constant 0 : index
    %3 = vector.load %arg3[%c0_3, %c0_4] : memref<1x128xf32, #tpu.memory_space<vmem>>, vector<1x128xf32>
    %4 = vector.broadcast %3 : vector<1x128xf32> to vector<32x128xf32>
    %5 = arith.addf %2, %4 : vector<32x128xf32>
    %cst_5 = arith.constant 0.000000e+00 : f32
    %6 = vector.broadcast %cst_5 : f32 to vector<32x128xf32>
    %7 = arith.maximumf %5, %6 : vector<32x128xf32>
    %c0_6 = arith.constant 0 : index
    %c0_7 = arith.constant 0 : index
    %8 = vector.load %arg4[%c0_6, %c0_7] : memref<2x32xf32, #tpu.memory_space<vmem>>, vector<2x32xf32>
    %cst_8 = arith.constant dense<0.000000e+00> : vector<2x128xf32>
    %9 = tpu.matmul %8, %7, %cst_8 {dimension_numbers = #tpu.dot_dimension_numbers<[1], [0], [0], [1], [0, 0, 1, 1], [], []>} : vector<2x32xf32>, vector<32x128xf32>, vector<2x128xf32> -> vector<2x128xf32>
    %c0_9 = arith.constant 0 : index
    %c0_10 = arith.constant 0 : index
    %10 = vector.load %arg5[%c0_9, %c0_10] : memref<128x128xf32, #tpu.memory_space<vmem>>, vector<128x128xf32>
    %cst_11 = arith.constant dense<0.000000e+00> : vector<2x128xf32>
    %11 = tpu.matmul %9, %10, %cst_11 {dimension_numbers = #tpu.dot_dimension_numbers<[1], [0], [0], [1], [0, 0, 1, 1], [], []>} : vector<2x128xf32>, vector<128x128xf32>, vector<2x128xf32> -> vector<2x128xf32>
    %c0_12 = arith.constant 0 : index
    %c0_13 = arith.constant 0 : index
    %12 = vector.load %arg6[%c0_12, %c0_13] : memref<1x128xf32, #tpu.memory_space<vmem>>, vector<1x128xf32>
    %13 = vector.broadcast %12 : vector<1x128xf32> to vector<2x128xf32>
    %14 = arith.addf %11, %13 : vector<2x128xf32>
    %c0_14 = arith.constant 0 : index
    %c0_15 = arith.constant 0 : index
    %15 = vector.load %arg7[%c0_14, %c0_15] : memref<2x128xf32, #tpu.memory_space<vmem>>, vector<2x128xf32>
    tpu.vector_store %arg7[%c0_14, %c0_15], %14 {strides = array<i32>} : memref<2x128xf32, #tpu.memory_space<vmem>>, vector<2x128xf32>,
    return
  }
  func.func @transform_0(%arg0: i32) -> (i32, i32) {
    %c0_i32 = arith.constant 0 : i32
    %c0_i32_0 = arith.constant 0 : i32
    %c0_i32_1 = arith.constant 0 : i32
    return %c0_i32, %c0_i32_0 : i32, i32
  }
  func.func @transform_1(%arg0: i32) -> (i32, i32) {
    %c0_i32 = arith.constant 0 : i32
    %c0_i32_0 = arith.constant 0 : i32
    %c0_i32_1 = arith.constant 0 : i32
    return %c0_i32, %c0_i32_0 : i32, i32
  }
  func.func @transform_2(%arg0: i32) -> (i32, i32) {
    %c0_i32 = arith.constant 0 : i32
    %c0_i32_0 = arith.constant 0 : i32
    %c0_i32_1 = arith.constant 0 : i32
    return %c0_i32, %c0_i32_0 : i32, i32
  }
  func.func @transform_3(%arg0: i32) -> (i32, i32) {
    %c0_i32 = arith.constant 0 : i32
    %c0_i32_0 = arith.constant 0 : i32
    %c0_i32_1 = arith.constant 0 : i32
    return %c0_i32, %c0_i32_0 : i32, i32
  }
  func.func @transform_4(%arg0: i32) -> (i32, i32) {
    %c0_i32 = arith.constant 0 : i32
    %c0_i32_0 = arith.constant 0 : i32
    %c0_i32_1 = arith.constant 0 : i32
    return %c0_i32, %c0_i32_0 : i32, i32
  }
  func.func @transform_5(%arg0: i32) -> (i32, i32) {
    %c0_i32 = arith.constant 0 : i32
    %c0_i32_0 = arith.constant 0 : i32
    %c0_i32_1 = arith.constant 0 : i32
    return %c0_i32, %c0_i32_0 : i32, i32
  }
  func.func @transform_6(%arg0: i32) -> (i32, i32) {
    %c0_i32 = arith.constant 0 : i32
    %c0_i32_0 = arith.constant 0 : i32
    %c0_i32_1 = arith.constant 0 : i32
    return %c0_i32, %c0_i32_0 : i32, i32
  }
}

</mosaic_0001>

<llo_original>
// kernel: tpu_custom_call.1
$region0: #{tpu_custom_call.1}
  #allocation0 [shape = 'u32[]', space=smem, size = 0x4, offset = 0x4, fixed_abs, tag = 'smem constant byte address 0x4 - core index']
  #allocation1 [shape = 'u32[72,128]{1,0:T(1,128)}', space=vmem, size = 0x9000, scoped, tag = 'internal scratch']
  %s0 = inlined_call_operand.hbm [shape: f32[32,640], index: 0, kind: input, shape index: {}]
  %s1 = inlined_call_operand.hbm [shape: f32[640,128], index: 1, kind: input, shape index: {}]
  %s2 = inlined_call_operand.hbm [shape: f32[1,128], index: 2, kind: input, shape index: {}]
  %s3 = inlined_call_operand.vmem [shape: f32[2,32], index: 3, kind: input, shape index: {}]
  %s4 = inlined_call_operand.hbm [shape: f32[128,128], index: 4, kind: input, shape index: {}]
  %s5 = inlined_call_operand.vmem [shape: f32[1,128], index: 5, kind: input, shape index: {}]
  %s6 = inlined_call_operand.hbm [shape: f32[2,128], index: 6, kind: output, shape index: {}]
  %s7 = sld [smem:[#allocation0]]
  $region50: #{tpu_custom_call.1} parent=0
    _
  %s9 = ssub.s32 1, %s7
  %s10 = scalar_select 0, %s9, %s7
  $region1: #{tpu_custom_call.1} parent=0
    #allocation2 [shape = 'u8[81920]{0}', space=vmem, size = 0x14000, scoped, tag = 'input window, operand 0, single buffered']
    #allocation3 [shape = 's32[1]{0}', space=sflag, size = 0x4, scoped, tag = 'scoped memory for tpu_custom_call.1']
    #allocation4 [shape = 's32[1]{0}', space=sflag, size = 0x4, scoped, tag = 'scoped memory for tpu_custom_call.1']
    #allocation5 [shape = 'u8[327680]{0}', space=vmem, size = 0x50000, scoped, tag = 'input window, operand 1, single buffered']
    #allocation6 [shape = 's32[1]{0}', space=sflag, size = 0x4, scoped, tag = 'scoped memory for tpu_custom_call.1']
    #allocation7 [shape = 'u8[512]{0}', space=vmem, size = 0x400, scoped, tag = 'input window, operand 2, single buffered']
    #allocation8 [shape = 'u8[65536]{0}', space=vmem, size = 0x10000, scoped, tag = 'input window, operand 4, single buffered']
    #allocation9 [shape = 's32[1]{0}', space=sflag, size = 0x4, scoped, tag = 'scoped memory for tpu_custom_call.1']
    #allocation10 [shape = 'u8[1024]{0}', space=vmem, size = 0x400, scoped, tag = 'output window, operand 0, single buffered']
    %11 = vsyncpa [#allocation3], 0
    %12 = vsyncpa [#allocation6], 0
    %13 = vsyncpa [#allocation9], 0
    %14 = vsyncpa [#allocation4], 0
    // Predicated region
    $region2: #{tpu_custom_call.1} parent=1 // pred_check
      _
    $region3: #{tpu_custom_call.1} parent=1 // pred_check_branch
      %16 = sbr.rel (0) target = $region5
    $region4: #{tpu_custom_call.1} parent=1 // pred_region
      %18 = vsyncadd [#allocation3], 0
      %s19 = sshll.u32 %s0, 4
      %s20 = int_to_ptr.hbm [resolvable:$true] %s19
      %s21 = sshll.u32 [#allocation2], 4
      %s22 = int_to_ptr.vmem [resolvable:$true] %s21
      %27 = dma.hbm_to_vmem [thread:$0]  %s20, 2560, %s22, [#allocation3], 640, 640, 40
    $region5: #{tpu_custom_call.1} parent=1 // pred_fallthru
      _
    // Predicated region
    $region6: #{tpu_custom_call.1} parent=1 // pred_check
      _
    $region7: #{tpu_custom_call.1} parent=1 // pred_check_branch
      %29 = sbr.rel (0) target = $region9
    $region8: #{tpu_custom_call.1} parent=1 // pred_region
      %31 = vsyncadd [#allocation6], 0
      %s32 = sshll.u32 %s1, 4
      %s33 = int_to_ptr.hbm [resolvable:$true] %s32
      %s34 = sshll.u32 [#allocation5], 4
      %s35 = int_to_ptr.vmem [resolvable:$true] %s34
      %40 = dma.hbm_to_vmem [thread:$0]  %s33, 10240, %s35, [#allocation6], 128, 128, 8
    $region9: #{tpu_custom_call.1} parent=1 // pred_fallthru
      _
    // Predicated region
    $region10: #{tpu_custom_call.1} parent=1 // pred_check
      _
    $region11: #{tpu_custom_call.1} parent=1 // pred_check_branch
      %42 = sbr.rel (0) target = $region13
    $region12: #{tpu_custom_call.1} parent=1 // pred_region
      %44 = vsyncadd [#allocation6], 0
      %s46 = sshll.u32 %s2, 4
      %s47 = int_to_ptr.hbm [resolvable:$true] %s46
      %s48 = sshll.u32 [#allocation7], 4
      %s49 = int_to_ptr.vmem [resolvable:$true] %s48
      %51 = dma.hbm_to_vmem [thread:$0]  %s47, 16, %s49, [#allocation6]
    $region13: #{tpu_custom_call.1} parent=1 // pred_fallthru
      _
    // Predicated region
    $region14: #{tpu_custom_call.1} parent=1 // pred_check
      _
    $region15: #{tpu_custom_call.1} parent=1 // pred_check_branch
      %53 = sbr.rel (0) target = $region17
    $region16: #{tpu_custom_call.1} parent=1 // pred_region
      _
    $region17: #{tpu_custom_call.1} parent=1 // pred_fallthru
      _
    // Predicated region
    $region18: #{tpu_custom_call.1} parent=1 // pred_check
      _
    $region19: #{tpu_custom_call.1} parent=1 // pred_check_branch
      %55 = sbr.rel (0) target = $region21
    $region20: #{tpu_custom_call.1} parent=1 // pred_region
      %57 = vsyncadd [#allocation9], 0
      %s58 = sshll.u32 %s4, 4
      %s59 = int_to_ptr.hbm [resolvable:$true] %s58
      %s60 = sshll.u32 [#allocation8], 4
      %s61 = int_to_ptr.vmem [resolvable:$true] %s60
      %66 = dma.hbm_to_vmem [thread:$0]  %s59, 2048, %s61, [#allocation9], 128, 128, 8
    $region21: #{tpu_custom_call.1} parent=1 // pred_fallthru
      _
    // Predicated region
    $region22: #{tpu_custom_call.1} parent=1 // pred_check
      _
    $region23: #{tpu_custom_call.1} parent=1 // pred_check_branch
      %68 = sbr.rel (0) target = $region25
    $region24: #{tpu_custom_call.1} parent=1 // pred_region
      _
    $region25: #{tpu_custom_call.1} parent=1 // pred_fallthru
      _
    // Predicated region
    $region26: #{tpu_custom_call.1} parent=1 // pred_check
      _
    $region27: #{tpu_custom_call.1} parent=1 // pred_check_branch
      %70 = sbr.rel (0) target = $region29
    $region28: #{tpu_custom_call.1} parent=1 // pred_region
      %72 = dma.done [#allocation3], 2560
    $region29: #{tpu_custom_call.1} parent=1 // pred_fallthru
      _
    // Predicated region
    $region30: #{tpu_custom_call.1} parent=1 // pred_check
      _
    $region31: #{tpu_custom_call.1} parent=1 // pred_check_branch
      %74 = sbr.rel (0) target = $region33
    $region32: #{tpu_custom_call.1} parent=1 // pred_region
      %76 = dma.done [#allocation6], 10240
    $region33: #{tpu_custom_call.1} parent=1 // pred_fallthru
      _
    // Predicated region
    $region34: #{tpu_custom_call.1} parent=1 // pred_check
      _
    $region35: #{tpu_custom_call.1} parent=1 // pred_check_branch
      %78 = sbr.rel (0) target = $region37
    $region36: #{tpu_custom_call.1} parent=1 // pred_region
      %80 = dma.done [#allocation6], 16
    $region37: #{tpu_custom_call.1} parent=1 // pred_fallthru
      _
    // Predicated region
    $region38: #{tpu_custom_call.1} parent=1 // pred_check
      _
    $region39: #{tpu_custom_call.1} parent=1 // pred_check_branch
      %82 = sbr.rel (0) target = $region41
    $region40: #{tpu_custom_call.1} parent=1 // pred_region
      %84 = dma.done [#allocation9], 2048
    $region41: #{tpu_custom_call.1} parent=1 // pred_fallthru
      _
    %v85 = vld [vmem:[#allocation2] sm:$0xff]
    %v86 = vld [vmem:[#allocation2 + $0x8] sm:$0xff]
    %v87 = vld [vmem:[#allocation2 + $0x10] sm:$0xff]
    %v88 = vld [vmem:[#allocation2 + $0x18] sm:$0xff]
    %v89 = vld [vmem:[#allocation2 + $0x20] sm:$0xff]
    %v90 = vld [vmem:[#allocation2 + $0x28] sm:$0xff]
    %v91 = vld [vmem:[#allocation2 + $0x30] sm:$0xff]
    %v92 = vld [vmem:[#allocation2 + $0x38] sm:$0xff]
    %v93 = vld [vmem:[#allocation2 + $0x40] sm:$0xff]
    %v94 = vld [vmem:[#allocation2 + $0x48] sm:$0xff]
    %v95 = vld [vmem:[#allocation2 + $0x50] sm:$0xff]
    %v96 = vld [vmem:[#allocation2 + $0x58] sm:$0xff]
    %v97 = vld [vmem:[#allocation2 + $0x60] sm:$0xff]
    %v98 = vld [vmem:[#allocation2 + $0x68] sm:$0xff]
    %v99 = vld [vmem:[#allocation2 + $0x70] sm:$0xff]
    %v100 = vld [vmem:[#allocation2 + $0x78] sm:$0xff]
    %v101 = vld [vmem:[#allocation2 + $0x80] sm:$0xff]
    %v102 = vld [vmem:[#allocation2 + $0x88] sm:$0xff]
    %v103 = vld [vmem:[#allocation2 + $0x90] sm:$0xff]
    %v104 = vld [vmem:[#allocation2 + $0x98] sm:$0xff]
    %v105 = vld [vmem:[#allocation5] sm:$0xff]
    %v106 = vld [vmem:[#allocation5 + $0x8] sm:$0xff]
    %v107 = vld [vmem:[#allocation5 + $0x10] sm:$0xff]
    %v108 = vld [vmem:[#allocation5 + $0x18] sm:$0xff]
    %v109 = vld [vmem:[#allocation5 + $0x20] sm:$0xff]
    %v110 = vld [vmem:[#allocation5 + $0x28] sm:$0xff]
    %v111 = vld [vmem:[#allocation5 + $0x30] sm:$0xff]
    %v112 = vld [vmem:[#allocation5 + $0x38] sm:$0xff]
    %v113 = vld [vmem:[#allocation5 + $0x40] sm:$0xff]
    %v114 = vld [vmem:[#allocation5 + $0x48] sm:$0xff]
    %v115 = vld [vmem:[#allocation5 + $0x50] sm:$0xff]
    %v116 = vld [vmem:[#allocation5 + $0x58] sm:$0xff]
    %v117 = vld [vmem:[#allocation5 + $0x60] sm:$0xff]
    %v118 = vld [vmem:[#allocation5 + $0x68] sm:$0xff]
    %v119 = vld [vmem:[#allocation5 + $0x70] sm:$0xff]
    %v120 = vld [vmem:[#allocation5 + $0x78] sm:$0xff]
    %v121 = vld [vmem:[#allocation5 + $0x80] sm:$0xff]
    %v122 = vld [vmem:[#allocation5 + $0x88] sm:$0xff]
    %v123 = vld [vmem:[#allocation5 + $0x90] sm:$0xff]
    %v124 = vld [vmem:[#allocation5 + $0x98] sm:$0xff]
    %v125 = vld [vmem:[#allocation5 + $0xa0] sm:$0xff]
    %v126 = vld [vmem:[#allocation5 + $0xa8] sm:$0xff]
    %v127 = vld [vmem:[#allocation5 + $0xb0] sm:$0xff]
    %v128 = vld [vmem:[#allocation5 + $0xb8] sm:$0xff]
    %v129 = vld [vmem:[#allocation5 + $0xc0] sm:$0xff]
    %v130 = vld [vmem:[#allocation5 + $0xc8] sm:$0xff]
    %v131 = vld [vmem:[#allocation5 + $0xd0] sm:$0xff]
    %v132 = vld [vmem:[#allocation5 + $0xd8] sm:$0xff]
    %v133 = vld [vmem:[#allocation5 + $0xe0] sm:$0xff]
    %v134 = vld [vmem:[#allocation5 + $0xe8] sm:$0xff]
    %v135 = vld [vmem:[#allocation5 + $0xf0] sm:$0xff]
    %v136 = vld [vmem:[#allocation5 + $0xf8] sm:$0xff]
    %v137 = vld [vmem:[#allocation5 + $0x100] sm:$0xff]
    %v138 = vld [vmem:[#allocation5 + $0x108] sm:$0xff]
    %v139 = vld [vmem:[#allocation5 + $0x110] sm:$0xff]
    %v140 = vld [vmem:[#allocation5 + $0x118] sm:$0xff]
    %v141 = vld [vmem:[#allocation5 + $0x120] sm:$0xff]
    %v142 = vld [vmem:[#allocation5 + $0x128] sm:$0xff]
    %v143 = vld [vmem:[#allocation5 + $0x130] sm:$0xff]
    %v144 = vld [vmem:[#allocation5 + $0x138] sm:$0xff]
    %v145 = vld [vmem:[#allocation5 + $0x140] sm:$0xff]
    %v146 = vld [vmem:[#allocation5 + $0x148] sm:$0xff]
    %v147 = vld [vmem:[#allocation5 + $0x150] sm:$0xff]
    %v148 = vld [vmem:[#allocation5 + $0x158] sm:$0xff]
    %v149 = vld [vmem:[#allocation5 + $0x160] sm:$0xff]
    %v150 = vld [vmem:[#allocation5 + $0x168] sm:$0xff]
    %v151 = vld [vmem:[#allocation5 + $0x170] sm:$0xff]
    %v152 = vld [vmem:[#allocation5 + $0x178] sm:$0xff]
    %v153 = vld [vmem:[#allocation5 + $0x180] sm:$0xff]
    %v154 = vld [vmem:[#allocation5 + $0x188] sm:$0xff]
    %v155 = vld [vmem:[#allocation5 + $0x190] sm:$0xff]
    %v156 = vld [vmem:[#allocation5 + $0x198] sm:$0xff]
    %v157 = vld [vmem:[#allocation5 + $0x1a0] sm:$0xff]
    %v158 = vld [vmem:[#allocation5 + $0x1a8] sm:$0xff]
    %v159 = vld [vmem:[#allocation5 + $0x1b0] sm:$0xff]
    %v160 = vld [vmem:[#allocation5 + $0x1b8] sm:$0xff]
    %v161 = vld [vmem:[#allocation5 + $0x1c0] sm:$0xff]
    %v162 = vld [vmem:[#allocation5 + $0x1c8] sm:$0xff]
    %v163 = vld [vmem:[#allocation5 + $0x1d0] sm:$0xff]
    %v164 = vld [vmem:[#allocation5 + $0x1d8] sm:$0xff]
    %v165 = vld [vmem:[#allocation5 + $0x1e0] sm:$0xff]
    %v166 = vld [vmem:[#allocation5 + $0x1e8] sm:$0xff]
    %v167 = vld [vmem:[#allocation5 + $0x1f0] sm:$0xff]
    %v168 = vld [vmem:[#allocation5 + $0x1f8] sm:$0xff]
    %v169 = vld [vmem:[#allocation5 + $0x200] sm:$0xff]
    %v170 = vld [vmem:[#allocation5 + $0x208] sm:$0xff]
    %v171 = vld [vmem:[#allocation5 + $0x210] sm:$0xff]
    %v172 = vld [vmem:[#allocation5 + $0x218] sm:$0xff]
    %v173 = vld [vmem:[#allocation5 + $0x220] sm:$0xff]
    %v174 = vld [vmem:[#allocation5 + $0x228] sm:$0xff]
    %v175 = vld [vmem:[#allocation5 + $0x230] sm:$0xff]
    %v176 = vld [vmem:[#allocation5 + $0x238] sm:$0xff]
    %v177 = vld [vmem:[#allocation5 + $0x240] sm:$0xff]
    %v178 = vld [vmem:[#allocation5 + $0x248] sm:$0xff]
    %v179 = vld [vmem:[#allocation5 + $0x250] sm:$0xff]
    %v180 = vld [vmem:[#allocation5 + $0x258] sm:$0xff]
    %v181 = vld [vmem:[#allocation5 + $0x260] sm:$0xff]
    %v182 = vld [vmem:[#allocation5 + $0x268] sm:$0xff]
    %v183 = vld [vmem:[#allocation5 + $0x270] sm:$0xff]
    %v184 = vld [vmem:[#allocation5 + $0x278] sm:$0xff]
    %v185 = vld [vmem:[#allocation7] sm:$0x1]
    %v187 = vperm.slane %v185, 0
    %189 = vmatpush.msra.mxu0 %v120
    %190 = vmatpush.msra.mxu0 %v119
    %191 = vmatpush.msra.mxu0 %v118
    %192 = vmatpush.msra.mxu0 %v117
    %193 = vmatpush.msra.mxu0 %v116
    %194 = vmatpush.msra.mxu0 %v115
    %195 = vmatpush.msra.mxu0 %v114
    %196 = vmatpush.msra.mxu0 %v113
    %197 = vmatpush.msra.mxu0 %v112
    %198 = vmatpush.msra.mxu0 %v111
    %199 = vmatpush.msra.mxu0 %v110
    %200 = vmatpush.msra.mxu0 %v109
    %201 = vmatpush.msra.mxu0 %v108
    %202 = vmatpush.msra.mxu0 %v107
    %203 = vmatpush.msra.mxu0 %v106
    %204 = vmatpush.msra.mxu0 %v105
    %205 = vmatmul.f32.gmra.mxu0 %v85
    %v206 = vpop.f32.mrf.mxu0
    %v207 = vadd.f32 %v187, %v206
    %208 = vmatmul.f32.gmra.mxu0 %v90
    %v209 = vpop.f32.mrf.mxu0
    %v210 = vadd.f32 %v187, %v209
    %211 = vmatmul.f32.gmra.mxu0 %v95
    %v212 = vpop.f32.mrf.mxu0
    %v213 = vadd.f32 %v187, %v212
    %214 = vmatmul.f32.gmra.mxu0 %v100
    %v215 = vpop.f32.mrf.mxu0
    %v216 = vadd.f32 %v187, %v215
    %217 = vdwg.mxu0
    %218 = vmatpush.msra.mxu0 %v136
    %219 = vmatpush.msra.mxu0 %v135
    %220 = vmatpush.msra.mxu0 %v134
    %221 = vmatpush.msra.mxu0 %v133
    %222 = vmatpush.msra.mxu0 %v132
    %223 = vmatpush.msra.mxu0 %v131
    %224 = vmatpush.msra.mxu0 %v130
    %225 = vmatpush.msra.mxu0 %v129
    %226 = vmatpush.msra.mxu0 %v128
    %227 = vmatpush.msra.mxu0 %v127
    %228 = vmatpush.msra.mxu0 %v126
    %229 = vmatpush.msra.mxu0 %v125
    %230 = vmatpush.msra.mxu0 %v124
    %231 = vmatpush.msra.mxu0 %v123
    %232 = vmatpush.msra.mxu0 %v122
    %233 = vmatpush.msra.mxu0 %v121
    %234 = vmatmul.f32.gmra.mxu0 %v86
    %v235 = vpop.f32.mrf.mxu0
    %v236 = vadd.f32 %v207, %v235
    %237 = vmatmul.f32.gmra.mxu0 %v91
    %v238 = vpop.f32.mrf.mxu0
    %v239 = vadd.f32 %v210, %v238
    %240 = vmatmul.f32.gmra.mxu0 %v96
    %v241 = vpop.f32.mrf.mxu0
    %v242 = vadd.f32 %v213, %v241
    %243 = vmatmul.f32.gmra.mxu0 %v101
    %v244 = vpop.f32.mrf.mxu0
    %v245 = vadd.f32 %v216, %v244
    %246 = vdwg.mxu0
    %247 = vmatpush.msra.mxu0 %v152
    %248 = vmatpush.msra.mxu0 %v151
    %249 = vmatpush.msra.mxu0 %v150
    %250 = vmatpush.msra.mxu0 %v149
    %251 = vmatpush.msra.mxu0 %v148
    %252 = vmatpush.msra.mxu0 %v147
    %253 = vmatpush.msra.mxu0 %v146
    %254 = vmatpush.msra.mxu0 %v145
    %255 = vmatpush.msra.mxu0 %v144
    %256 = vmatpush.msra.mxu0 %v143
    %257 = vmatpush.msra.mxu0 %v142
    %258 = vmatpush.msra.mxu0 %v141
    %259 = vmatpush.msra.mxu0 %v140
    %260 = vmatpush.msra.mxu0 %v139
    %261 = vmatpush.msra.mxu0 %v138
    %262 = vmatpush.msra.mxu0 %v137
    %263 = vmatmul.f32.gmra.mxu0 %v87
    %v264 = vpop.f32.mrf.mxu0
    %v265 = vadd.f32 %v236, %v264
    %266 = vmatmul.f32.gmra.mxu0 %v92
    %v267 = vpop.f32.mrf.mxu0
    %v268 = vadd.f32 %v239, %v267
    %269 = vmatmul.f32.gmra.mxu0 %v97
    %v270 = vpop.f32.mrf.mxu0
    %v271 = vadd.f32 %v242, %v270
    %272 = vmatmul.f32.gmra.mxu0 %v102
    %v273 = vpop.f32.mrf.mxu0
    %v274 = vadd.f32 %v245, %v273
    %275 = vdwg.mxu0
    %276 = vmatpush.msra.mxu0 %v168
    %277 = vmatpush.msra.mxu0 %v167
    %278 = vmatpush.msra.mxu0 %v166
    %279 = vmatpush.msra.mxu0 %v165
    %280 = vmatpush.msra.mxu0 %v164
    %281 = vmatpush.msra.mxu0 %v163
    %282 = vmatpush.msra.mxu0 %v162
    %283 = vmatpush.msra.mxu0 %v161
    %284 = vmatpush.msra.mxu0 %v160
    %285 = vmatpush.msra.mxu0 %v159
    %286 = vmatpush.msra.mxu0 %v158
    %287 = vmatpush.msra.mxu0 %v157
    %288 = vmatpush.msra.mxu0 %v156
    %289 = vmatpush.msra.mxu0 %v155
    %290 = vmatpush.msra.mxu0 %v154
    %291 = vmatpush.msra.mxu0 %v153
    %292 = vmatmul.f32.gmra.mxu0 %v88
    %v293 = vpop.f32.mrf.mxu0
    %v294 = vadd.f32 %v265, %v293
    %295 = vmatmul.f32.gmra.mxu0 %v93
    %v296 = vpop.f32.mrf.mxu0
    %v297 = vadd.f32 %v268, %v296
    %298 = vmatmul.f32.gmra.mxu0 %v98
    %v299 = vpop.f32.mrf.mxu0
    %v300 = vadd.f32 %v271, %v299
    %301 = vmatmul.f32.gmra.mxu0 %v103
    %v302 = vpop.f32.mrf.mxu0
    %v303 = vadd.f32 %v274, %v302
    %304 = vdwg.mxu0
    %305 = vmatpush.msra.mxu0 %v184
    %306 = vmatpush.msra.mxu0 %v183
    %307 = vmatpush.msra.mxu0 %v182
    %308 = vmatpush.msra.mxu0 %v181
    %309 = vmatpush.msra.mxu0 %v180
    %310 = vmatpush.msra.mxu0 %v179
    %311 = vmatpush.msra.mxu0 %v178
    %312 = vmatpush.msra.mxu0 %v177
    %313 = vmatpush.msra.mxu0 %v176
    %314 = vmatpush.msra.mxu0 %v175
    %315 = vmatpush.msra.mxu0 %v174
    %316 = vmatpush.msra.mxu0 %v173
    %317 = vmatpush.msra.mxu0 %v172
    %318 = vmatpush.msra.mxu0 %v171
    %319 = vmatpush.msra.mxu0 %v170
    %320 = vmatpush.msra.mxu0 %v169
    %321 = vmatmul.f32.gmra.mxu0 %v89
    %v322 = vpop.f32.mrf.mxu0
    %v323 = vadd.f32 %v294, %v322
    %324 = vmatmul.f32.gmra.mxu0 %v94
    %v325 = vpop.f32.mrf.mxu0
    %v326 = vadd.f32 %v297, %v325
    %327 = vmatmul.f32.gmra.mxu0 %v99
    %v328 = vpop.f32.mrf.mxu0
    %v329 = vadd.f32 %v300, %v328
    %330 = vmatmul.f32.gmra.mxu0 %v104
    %v331 = vpop.f32.mrf.mxu0
    %v332 = vadd.f32 %v303, %v331
    %333 = vdwg.mxu0
    %v334 = vmax.f32 %v323, 0.0
    %v335 = vmax.f32 %v326, 0.0
    %v336 = vmax.f32 %v329, 0.0
    %v337 = vmax.f32 %v332, 0.0
    %v338 = vld [vmem:[%s3] sm:$0x3]
    %vm339 = vcmask 261120
    %v341 = vsel %vm339, %v338, 0
    %343 = vmatpush.msra.mxu0 0.0
    %344 = vmatpush.msra.mxu0 0.0
    %345 = vmatpush.msra.mxu0 0.0
    %346 = vmatpush.msra.mxu0 0.0
    %347 = vmatpush.msra.mxu0 0.0
    %348 = vmatpush.msra.mxu0 0.0
    %349 = vmatpush.msra.mxu0 0.0
    %350 = vmatpush.msra.mxu0 0.0
    %351 = vmatpush.msra.mxu0 0.0
    %352 = vmatpush.msra.mxu0 0.0
    %353 = vmatpush.msra.mxu0 0.0
    %354 = vmatpush.msra.mxu0 0.0
    %355 = vmatpush.msra.mxu0 %v337
    %356 = vmatpush.msra.mxu0 %v336
    %357 = vmatpush.msra.mxu0 %v335
    %358 = vmatpush.msra.mxu0 %v334
    %359 = vmatmul.f32.gmra.mxu0 %v341
    %v360 = vpop.f32.mrf.mxu0
    %v361 = vadd.f32 0.0, %v360
    %362 = vdwg.mxu0
    %v363 = vld [vmem:[#allocation8] sm:$0xff]
    %v364 = vld [vmem:[#allocation8 + $0x8] sm:$0xff]
    %v365 = vld [vmem:[#allocation8 + $0x10] sm:$0xff]
    %v366 = vld [vmem:[#allocation8 + $0x18] sm:$0xff]
    %v367 = vld [vmem:[#allocation8 + $0x20] sm:$0xff]
    %v368 = vld [vmem:[#allocation8 + $0x28] sm:$0xff]
    %v369 = vld [vmem:[#allocation8 + $0x30] sm:$0xff]
    %v370 = vld [vmem:[#allocation8 + $0x38] sm:$0xff]
    %v371 = vld [vmem:[#allocation8 + $0x40] sm:$0xff]
    %v372 = vld [vmem:[#allocation8 + $0x48] sm:$0xff]
    %v373 = vld [vmem:[#allocation8 + $0x50] sm:$0xff]
    %v374 = vld [vmem:[#allocation8 + $0x58] sm:$0xff]
    %v375 = vld [vmem:[#allocation8 + $0x60] sm:$0xff]
    %v376 = vld [vmem:[#allocation8 + $0x68] sm:$0xff]
    %v377 = vld [vmem:[#allocation8 + $0x70] sm:$0xff]
    %v378 = vld [vmem:[#allocation8 + $0x78] sm:$0xff]
    %v379 = vld [vmem:[%s5] sm:$0x1]
    %v381 = vperm.slane %v379, 0
    %383 = vmatpush.msra.mxu0 %v378
    %384 = vmatpush.msra.mxu0 %v377
    %385 = vmatpush.msra.mxu0 %v376
    %386 = vmatpush.msra.mxu0 %v375
    %387 = vmatpush.msra.mxu0 %v374
    %388 = vmatpush.msra.mxu0 %v373
    %389 = vmatpush.msra.mxu0 %v372
    %390 = vmatpush.msra.mxu0 %v371
    %391 = vmatpush.msra.mxu0 %v370
    %392 = vmatpush.msra.mxu0 %v369
    %393 = vmatpush.msra.mxu0 %v368
    %394 = vmatpush.msra.mxu0 %v367
    %395 = vmatpush.msra.mxu0 %v366
    %396 = vmatpush.msra.mxu0 %v365
    %397 = vmatpush.msra.mxu0 %v364
    %398 = vmatpush.msra.mxu0 %v363
    %399 = vmatmul.f32.gmra.mxu0 %v361
    %v400 = vpop.f32.mrf.mxu0
    %v401 = vadd.f32 %v381, %v400
    %402 = vdwg.mxu0
    %403 = vst [vmem:[#allocation10] sm:$0x3] %v401
    // Predicated region
    $region42: #{tpu_custom_call.1} parent=1 // pred_check
      _
    $region43: #{tpu_custom_call.1} parent=1 // pred_check_branch
      %405 = sbr.rel (0) target = $region45
    $region44: #{tpu_custom_call.1} parent=1 // pred_region
      %407 = vsyncadd [#allocation4], 0
      %s409 = sshll.u32 [#allocation10], 4
      %s410 = int_to_ptr.vmem [resolvable:$true] %s409
      %s411 = sshll.u32 %s6, 4
      %s412 = int_to_ptr.hbm [resolvable:$true] %s411
      %414 = dma.vmem_to_hbm [thread:$0]  %s410, 32, %s412, [#allocation4]
    $region45: #{tpu_custom_call.1} parent=1 // pred_fallthru
      _
    // Predicated region
    $region46: #{tpu_custom_call.1} parent=1 // pred_check
      _
    $region47: #{tpu_custom_call.1} parent=1 // pred_check_branch
      %416 = sbr.rel (0) target = $region49
    $region48: #{tpu_custom_call.1} parent=1 // pred_region
      %418 = dma.done [#allocation4], 32
    $region49: #{tpu_custom_call.1} parent=1 // pred_fallthru
      _
    %419 = vsyncpa [#allocation3], 1
    %420 = vsyncpa [#allocation6], 1
    %421 = vsyncpa [#allocation9], 1
    %422 = vsyncpa [#allocation4], 1

</llo_original>
